<compile_context>
chip_gen: v5e
topology: v5e:2x2
jax: 0.10.0
libtpu: 0.0.40
codegen_flags: <defaults>
</compile_context>

<pallas_src>
import jax
import jax.numpy as jnp
from jax.experimental import pallas as pl
from jax.experimental.pallas import tpu as pltpu


_TILE_BYTES_BUDGET = 3 * 1024 * 1024    # per grid step (3 input planes + output)
_LANE_DENSE_MAX_W = 2048                # cap for the lane-dense reshaped width
_BUFFERED3_MAX_TILE = 4 * 1024 * 1024   # input-tile size under which Buffered(3) is used
_TARGET_ROW_STEPS = 4                   # >= 2 grid steps per TensorCore on v7x (2 TCs)


def _rgb2y_kernel(x_ref, o_ref):
    # x_ref: (3, TH, TW) input tile in its *native* dtype (cast done here).
    # o_ref: (TH, TW) output tile.
    r = x_ref[0].astype(jnp.float32)
    g = x_ref[1].astype(jnp.float32)
    b = x_ref[2].astype(jnp.float32)
    # 3 vmul + 3 vadd on the VPU; no MXU reformulation (HBM-bound op).
    y = r * 0.257 + g * 0.504 + b * 0.098 + (1.0 / 16.0)
    o_ref[...] = y.astype(o_ref.dtype)


def _round_up(x: int, m: int) -> int:
    return ((x + m - 1) // m) * m


def rgb2ycbcr(x: jax.Array) -> jax.Array:
    """Pallas implementation of RGB2YCbCr.forward (Y plane, as in the module)."""
    assert x.ndim in (3, 4), "expected (C, H, W) or (N, C, H, W)"
    if x.ndim == 3:
        x = x[None]                      # metadata-only: (1, C, H, W)
    N, C, H, W = x.shape
    assert C >= 3, "RGB2YCbCr needs at least 3 channels"

    # PyTorch promotion: float tensor keeps its dtype (weak python-float RHS),
    # integer promotes to the default float; clamp f64 -> f32 for TPU.
    out_dtype = jnp.result_type(x.dtype, float)
    if out_dtype == jnp.float64:
        out_dtype = jnp.float32

    in_itemsize = jnp.dtype(x.dtype).itemsize
    out_itemsize = jnp.dtype(out_dtype).itemsize
    bytes_per_px = 3 * in_itemsize + out_itemsize
    # Sublane granularity for the narrowest dtype involved (f32:8, bf16:16, u8:32).
    sub = max(1, 4 // min(in_itemsize, out_itemsize)) * 8

    # ---- lane-dense spatial layout -----------------------------------------
    # If W isn't a multiple of 128 but H*W is, view the contiguous plane as
    # (H*W / W2, W2) with W2 the largest multiple-of-128 divisor of H*W up to
    # 2048 (metadata-only reshape; same flat pixel order) -> unmasked stores
    # and wide contiguous DMA rows.
    if W % 128 == 0:
        H2, W2 = H, W
    elif (H * W) % 128 == 0:
        W2 = 128
        for k in range(min(_LANE_DENSE_MAX_W, H * W) // 128, 0, -1):
            if (H * W) % (k * 128) == 0:
                W2 = k * 128
                break
        H2 = (H * W) // W2
    else:
        H2, W2 = H, W

    # ---- robustness guard: very wide, non-128-aligned W ---------------------
    # If even a minimal (sub-row) full-width band exceeds the budget and W2 is
    # not 128-aligned (so it can't be tiled), pad W to a multiple of 128 (one
    # extra pass, rare) and crop the output afterwards.
    pad_w = 0
    if W2 % 128 != 0 and bytes_per_px * W2 * sub > _TILE_BYTES_BUDGET:
        pad_w = _round_up(W, 128) - W
        x = jnp.pad(x, ((0, 0), (0, 0), (0, 0), (0, pad_w)))
        H2, W2 = H, W + pad_w

    x = x.reshape(N, C, H2, W2)

    # ---- width tile: full width (contiguous DMA) unless it can't fit --------
    if W2 % 128 == 0 and bytes_per_px * W2 * sub > _TILE_BYTES_BUDGET:
        TW = max(128, (_TILE_BYTES_BUDGET // (bytes_per_px * sub)) // 128 * 128)
    else:
        TW = W2

    # ---- row tile: fit the budget, then guarantee >= 4 row steps ------------
    if H2 <= sub:
        TH = H2                                           # full-dim block
    else:
        TH = max(sub, (_TILE_BYTES_BUDGET // (bytes_per_px * TW)) // sub * sub)
        TH = min(TH, _round_up(H2, sub))
        if pl.cdiv(H2, TH) < _TARGET_ROW_STEPS:
            # >= 2 pipelined steps per TensorCore on v7x; pipelining on 1-TC chips.
            TH = max(sub, _round_up(pl.cdiv(H2, _TARGET_ROW_STEPS), sub))

    grid = (pl.cdiv(H2, TH), pl.cdiv(W2, TW))
    n_steps = grid[0] * grid[1]

    # 3-deep input buffering only when steps are short and plentiful.
    in_tile_bytes = 3 * in_itemsize * TH * TW
    if n_steps >= 3 and in_tile_bytes <= _BUFFERED3_MAX_TILE:
        in_spec = pl.BlockSpec((None, 3, TH, TW), lambda i, j: (0, 0, i, j),
                               pipeline_mode=pl.Buffered(3))
    else:
        in_spec = pl.BlockSpec((None, 3, TH, TW), lambda i, j: (0, 0, i, j))

    out = pl.pallas_call(
        _rgb2y_kernel,
        out_shape=jax.ShapeDtypeStruct((H2, W2), out_dtype),
        grid_spec=pltpu.PrefetchScalarGridSpec(
            num_scalar_prefetch=0,
            grid=grid,
            in_specs=[in_spec],
            out_specs=pl.BlockSpec((TH, TW), lambda i, j: (i, j)),
        ),
        compiler_params=pltpu.CompilerParams(
            dimension_semantics=("parallel", "parallel"),
            vmem_limit_bytes=32 * 1024 * 1024,   # margin only; footprint <= ~9 MiB
        ),
        cost_estimate=pl.CostEstimate(
            flops=7 * H2 * W2,
            transcendentals=0,
            bytes_accessed=H2 * W2 * bytes_per_px,
        ),
    )(x)

    if pad_w:
        return out[:, :W]
    return out.reshape(H, W)


def _ref(x: jax.Array) -> jax.Array:
    # Pure-JAX reference for correctness checking (matches the PyTorch module).
    if x.ndim == 4:
        x = x[0]
    r = x[0].astype(jnp.float32)
    g = x[1].astype(jnp.float32)
    b = x[2].astype(jnp.float32)
    y = r * 0.257 + g * 0.504 + b * 0.098 + 1.0 / 16.0
    out_dtype = jnp.result_type(x.dtype, float)
    if out_dtype == jnp.float64:
        out_dtype = jnp.float32
    return y.astype(out_dtype)


if __name__ == "__main__":
    key = jax.random.PRNGKey(0)
    k3, k4, k5 = jax.random.split(key, 3)

    # 3D case: (C, H, W), float32 (module's 3-D branch).
    x3 = jax.random.uniform(k3, (3, 16, 16), dtype=jnp.float32)
    # 4D case: (N, C, H, W) with extra channels and bf16 (in-kernel cast path).
    x4 = jax.random.uniform(k4, (2, 4, 16, 16), dtype=jnp.float32).astype(jnp.bfloat16)
    # Larger 3D case: exercises multi-step row tiling and the Buffered(3) path.
    x5 = jax.random.uniform(k5, (3, 512, 256), dtype=jnp.float32)

    y3 = jax.block_until_ready(rgb2ycbcr(x3))
    y4 = jax.block_until_ready(rgb2ycbcr(x4))
    y5 = jax.block_until_ready(rgb2ycbcr(x5))

    assert y3.shape == (16, 16) and y3.dtype == jnp.float32
    assert y4.shape == (16, 16) and y4.dtype == jnp.bfloat16
    assert y5.shape == (512, 256) and y5.dtype == jnp.float32

    assert jnp.allclose(y3, _ref(x3), atol=1e-5, rtol=1e-5)
    assert jnp.allclose(y4.astype(jnp.float32), _ref(x4).astype(jnp.float32),
                        atol=2e-2, rtol=2e-2)
    assert jnp.allclose(y5, _ref(x5), atol=1e-5, rtol=1e-5)

    print("KERNEL_OK")
</pallas_src>

<mosaic_0001>
module attributes {stable_mosaic.version = 11 : i64} {
  func.func @_rgb2y_kernel(%arg0: i32, %arg1: i32, %arg2: memref<1x3x1x256xf32, #tpu.memory_space<vmem>>, %arg3: memref<1x256xf32, #tpu.memory_space<vmem>>) attributes {dimension_semantics = [#tpu.dimension_semantics<parallel>, #tpu.dimension_semantics<parallel>], iteration_bounds = array<i64: 1, 1>, scalar_prefetch = 0 : i64, scratch_operands = 0 : i64, tpu.core_type = #tpu.core_type<tc>, window_params = [{transform_indices = @transform_0, window_bounds = array<i64: 1, 3, 1, 256>}, {transform_indices = @transform_1, window_bounds = array<i64: 1, 256>}]} {
    %c0 = arith.constant 0 : index
    %c0_0 = arith.constant 0 : index
    %c0_1 = arith.constant 0 : index
    %c0_2 = arith.constant 0 : index
    %0 = vector.load %arg2[%c0, %c0_0, %c0_1, %c0_2] : memref<1x3x1x256xf32, #tpu.memory_space<vmem>>, vector<1x1x1x256xf32>
    %1 = vector.shape_cast %0 : vector<1x1x1x256xf32> to vector<1x256xf32>
    %c0_3 = arith.constant 0 : index
    %c1 = arith.constant 1 : index
    %c0_4 = arith.constant 0 : index
    %c0_5 = arith.constant 0 : index
    %2 = vector.load %arg2[%c0_3, %c1, %c0_4, %c0_5] : memref<1x3x1x256xf32, #tpu.memory_space<vmem>>, vector<1x1x1x256xf32>
    %3 = vector.shape_cast %2 : vector<1x1x1x256xf32> to vector<1x256xf32>
    %c0_6 = arith.constant 0 : index
    %c2 = arith.constant 2 : index
    %c0_7 = arith.constant 0 : index
    %c0_8 = arith.constant 0 : index
    %4 = vector.load %arg2[%c0_6, %c2, %c0_7, %c0_8] : memref<1x3x1x256xf32, #tpu.memory_space<vmem>>, vector<1x1x1x256xf32>
    %5 = vector.shape_cast %4 : vector<1x1x1x256xf32> to vector<1x256xf32>
    %cst = arith.constant 2.570000e-01 : f32
    %6 = vector.broadcast %cst : f32 to vector<1x256xf32>
    %7 = arith.mulf %1, %6 : vector<1x256xf32>
    %cst_9 = arith.constant 5.040000e-01 : f32
    %8 = vector.broadcast %cst_9 : f32 to vector<1x256xf32>
    %9 = arith.mulf %3, %8 : vector<1x256xf32>
    %10 = arith.addf %7, %9 : vector<1x256xf32>
    %cst_10 = arith.constant 0.0979999974 : f32
    %11 = vector.broadcast %cst_10 : f32 to vector<1x256xf32>
    %12 = arith.mulf %5, %11 : vector<1x256xf32>
    %13 = arith.addf %10, %12 : vector<1x256xf32>
    %cst_11 = arith.constant 6.250000e-02 : f32
    %14 = vector.broadcast %cst_11 : f32 to vector<1x256xf32>
    %15 = arith.addf %13, %14 : vector<1x256xf32>
    %c0_12 = arith.constant 0 : index
    %c0_13 = arith.constant 0 : index
    %16 = vector.load %arg3[%c0_12, %c0_13] : memref<1x256xf32, #tpu.memory_space<vmem>>, vector<1x256xf32>
    tpu.vector_store %arg3[%c0_12, %c0_13], %15 {strides = array<i32>} : memref<1x256xf32, #tpu.memory_space<vmem>>, vector<1x256xf32>,
    return
  }
  func.func @transform_0(%arg0: i32, %arg1: i32) -> (i32, i32, i32, i32) {
    %c0_i32 = arith.constant 0 : i32
    %c0_i32_0 = arith.constant 0 : i32
    %c0_i32_1 = arith.constant 0 : i32
    return %c0_i32, %c0_i32_0, %arg0, %arg1 : i32, i32, i32, i32
  }
  func.func @transform_1(%arg0: i32, %arg1: i32) -> (i32, i32) {
    %c0_i32 = arith.constant 0 : i32
    return %arg0, %arg1 : i32, i32
  }
}

</mosaic_0001>

<llo_original>
// kernel: tpu_custom_call.1
$region0: #{tpu_custom_call.1}
  #allocation0 [shape = 'u32[]', space=smem, size = 0x4, offset = 0x4, fixed_abs, tag = 'smem constant byte address 0x4 - core index']
  #allocation1 [shape = 'u32[72,128]{1,0:T(1,128)}', space=vmem, size = 0x9000, scoped, tag = 'internal scratch']
  %s0 = inlined_call_operand.hbm [shape: f32[1,3,1,256], index: 0, kind: input, shape index: {}]
  %s1 = inlined_call_operand.hbm [shape: f32[1,256], index: 1, kind: output, shape index: {}]
  %s2 = sld [smem:[#allocation0]]
  $region18: #{tpu_custom_call.1} parent=0
    _
  %s4 = ssub.s32 1, %s2
  %s5 = scalar_select 0, %s4, %s2
  $region1: #{tpu_custom_call.1} parent=0
    #allocation2 [shape = 'u8[3072]{0}', space=vmem, size = 0xc00, scoped, tag = 'input window, operand 0, single buffered']
    #allocation3 [shape = 's32[1]{0}', space=sflag, size = 0x4, scoped, tag = 'scoped memory for tpu_custom_call.1']
    #allocation4 [shape = 's32[1]{0}', space=sflag, size = 0x4, scoped, tag = 'scoped memory for tpu_custom_call.1']
    #allocation5 [shape = 'u8[1024]{0}', space=vmem, size = 0x400, scoped, tag = 'output window, operand 0, single buffered']
    %6 = vsyncpa [#allocation3], 0
    %7 = vsyncpa [#allocation4], 0
    // Predicated region
    $region2: #{tpu_custom_call.1} parent=1 // pred_check
      _
    $region3: #{tpu_custom_call.1} parent=1 // pred_check_branch
      %9 = sbr.rel (0) target = $region5
    $region4: #{tpu_custom_call.1} parent=1 // pred_region
      %11 = vsyncadd [#allocation3], 0
      %s12 = sshll.u32 %s0, 4
      %s13 = int_to_ptr.hbm [resolvable:$true] %s12
      %s14 = sshll.u32 [#allocation2], 4
      %s15 = int_to_ptr.vmem [resolvable:$true] %s14
      %20 = dma.hbm_to_vmem [thread:$0]  %s13, 96, %s15, [#allocation3], 32, 32, 2
    $region5: #{tpu_custom_call.1} parent=1 // pred_fallthru
      _
    // Predicated region
    $region6: #{tpu_custom_call.1} parent=1 // pred_check
      _
    $region7: #{tpu_custom_call.1} parent=1 // pred_check_branch
      %22 = sbr.rel (0) target = $region9
    $region8: #{tpu_custom_call.1} parent=1 // pred_region
      %24 = dma.done [#allocation3], 96
    $region9: #{tpu_custom_call.1} parent=1 // pred_fallthru
      _
    %v25 = vld [vmem:[#allocation2] sm:$0x3]
    %s26 = scalar_lea.vmem [#allocation2], 2
    %v27 = vld [vmem:[%s26] sm:$0x3]
    %s28 = scalar_lea.vmem [#allocation2], 4
    %v29 = vld [vmem:[%s28] sm:$0x3]
    %v30 = vmul.f32 %v25, 0.257
    %v31 = vmul.f32 %v27, 0.504
    %v32 = vadd.f32 %v30, %v31
    %v33 = vmul.f32 %v29, 0.098
    %v34 = vadd.f32 %v32, %v33
    %v35 = vadd.f32 %v34, 0.0625
    %v36 = vlaneseq
    %vm37 = vcmp.ge.s32.totalorder %v36, 0
    %vm38 = vcmp.lt.s32.totalorder %v36, 256
    %vm39 = vmand %vm37, %vm38
    %40 = vst.msk [vmem:[#allocation5] sm:$0x3] %vm39, %v35
    // Predicated region
    $region10: #{tpu_custom_call.1} parent=1 // pred_check
      _
    $region11: #{tpu_custom_call.1} parent=1 // pred_check_branch
      %42 = sbr.rel (0) target = $region13
    $region12: #{tpu_custom_call.1} parent=1 // pred_region
      %44 = vsyncadd [#allocation4], 0
      %s46 = sshll.u32 [#allocation5], 4
      %s47 = int_to_ptr.vmem [resolvable:$true] %s46
      %s48 = sshll.u32 %s1, 4
      %s49 = int_to_ptr.hbm [resolvable:$true] %s48
      %51 = dma.vmem_to_hbm [thread:$0]  %s47, 32, %s49, [#allocation4]
    $region13: #{tpu_custom_call.1} parent=1 // pred_fallthru
      _
    // Predicated region
    $region14: #{tpu_custom_call.1} parent=1 // pred_check
      _
    $region15: #{tpu_custom_call.1} parent=1 // pred_check_branch
      %53 = sbr.rel (0) target = $region17
    $region16: #{tpu_custom_call.1} parent=1 // pred_region
      %55 = dma.done [#allocation4], 32
    $region17: #{tpu_custom_call.1} parent=1 // pred_fallthru
      _
    %56 = vsyncpa [#allocation3], 1
    %57 = vsyncpa [#allocation4], 1

</llo_original>
